<compile_context>
chip_gen: v5e
topology: v5e:2x2
jax: 0.10.0
libtpu: 0.0.40
codegen_flags: <defaults>
</compile_context>

<pallas_src>
import functools

import jax
import jax.numpy as jnp
from jax import lax
from jax.experimental import pallas as pl
from jax.experimental.pallas import tpu as pltpu


def _round_up(v, m):
    return ((v + m - 1) // m) * m


def _tpu_config():
    """(generation, per-input-buffer byte target, vmem_limit_bytes)."""
    kind = ""
    try:
        kind = jax.devices()[0].device_kind.lower()
    except Exception:
        pass
    if "7" in kind:                       # v7x: 64 MiB physical VMEM, 2 TCs
        return "v7", 6 * 2**20, 48 * 2**20
    if "v6" in kind:                      # v6e: 128 MiB VMEM, ~1.4 TB/s HBM
        return "v6", 4 * 2**20, 64 * 2**20
    if "v5" in kind:                      # v5e: 128 MiB VMEM, ~0.82 TB/s HBM
        return "v5", 3 * 2**20, 64 * 2**20
    return "unknown", 4 * 2**20, 48 * 2**20


def _pick_tile_rows(c, r, itemsize, batch, gen, in_buf_target, vmem_limit):
    """Rows-of-128-lanes per tile (multiple of 8, VMEM-budgeted)."""
    tr = in_buf_target // (c * 128 * itemsize)
    tr = max(8, (tr // 8) * 8)
    tr = min(tr, r)

    # Clamp by VMEM working set: 2x input buffers (input dtype) + 2x output
    # buffers (f32) + ~4 full-tile f32 temporaries inside the kernel.
    per_row = 2 * c * 128 * itemsize + 2 * 128 * 4 + 4 * c * 128 * 4
    budget = max(4 * 2**20, vmem_limit - 8 * 2**20)
    tr_cap = max(8, (budget // per_row // 8) * 8)
    tr = min(tr, tr_cap)

    # v7x megacore: make sure both TensorCores get grid steps.
    if gen == "v7":
        while tr > 8 and batch * pl.cdiv(r, tr) < 4:
            tr = max(8, ((tr // 2) // 8) * 8)
    return tr


def _entropy_map_kernel(x_ref, out_ref):
    """x_ref: (C, TR, 128) input dtype -> out_ref: (TR, 128) per-pixel entropy."""
    x = x_ref[...].astype(jnp.float32)
    m = jnp.max(x, axis=0, keepdims=True)            # VPU max across C vregs
    z = x - m
    e = jnp.exp(z)
    s = jnp.sum(e, axis=0)                           # (TR, 128)
    ez = jnp.sum(e * z, axis=0)                      # (TR, 128)
    ent = jnp.log(s) - ez * pl.reciprocal(s, approx=True)
    out_ref[...] = ent.astype(out_ref.dtype)


def _make_psum_kernel(s_valid, tr):
    """Per-tile partial-sum kernel for reduction='mean'/'sum'."""

    def kernel(x_ref, psum_ref):
        ri = pl.program_id(1)
        x = x_ref[...].astype(jnp.float32)            # (C, TR, 128)
        m = jnp.max(x, axis=0, keepdims=True)
        z = x - m
        e = jnp.exp(z)
        s = jnp.sum(e, axis=0)                        # (TR, 128)
        ez = jnp.sum(e * z, axis=0)                   # (TR, 128)
        ent = jnp.log(s) - ez * pl.reciprocal(s, approx=True)

        # Mask padded lanes / row-tile overshoot: valid flat index < s_valid.
        row_ids = lax.broadcasted_iota(jnp.int32, (tr, 128), 0)
        lane_ids = lax.broadcasted_iota(jnp.int32, (tr, 128), 1)
        flat = (ri * tr + row_ids) * 128 + lane_ids
        ent = jnp.where(flat < s_valid, ent, 0.0)

        # Fold rows into an (8, 128) partial tile (pure VPU adds across vregs).
        psum_ref[...] = ent.reshape(tr // 8, 8, 128).sum(axis=0)

    return kernel


@functools.partial(jax.jit, static_argnames=("reduction",))
def entropy_loss(x, reduction="mean"):
    """Pallas implementation of Entropy_Loss.forward for NCHW input x."""
    b, c, h, w = x.shape
    s = h * w
    itemsize = jnp.dtype(x.dtype).itemsize

    gen, in_buf_target, vmem_limit = _tpu_config()

    # Pad flattened spatial to a multiple of 1024 (= 8 sublanes x 128 lanes)
    # so the dense 3-D view (B, C, R, 128) with R % 8 == 0 always exists.
    s_pad = _round_up(s, 1024)
    xr = x.reshape(b, c, s)
    if s_pad != s:
        xr = jnp.pad(xr, ((0, 0), (0, 0), (0, s_pad - s)))
    r = s_pad // 128
    xr = xr.reshape(b, c, r, 128)

    tr = _pick_tile_rows(c, r, itemsize, b, gen, in_buf_target, vmem_limit)
    n_tiles = pl.cdiv(r, tr)
    grid = (b, n_tiles)

    in_spec = pl.BlockSpec((None, c, tr, 128), lambda bi, ri: (bi, 0, ri, 0))
    cparams = pltpu.CompilerParams(
        dimension_semantics=("parallel", "parallel"),
        vmem_limit_bytes=vmem_limit,
    )

    if reduction == "none":
        rows = pl.pallas_call(
            _entropy_map_kernel,
            out_shape=jax.ShapeDtypeStruct((b, r, 128), x.dtype),
            grid_spec=pltpu.PrefetchScalarGridSpec(
                num_scalar_prefetch=0,
                grid=grid,
                in_specs=[in_spec],
                out_specs=pl.BlockSpec((None, tr, 128),
                                       lambda bi, ri: (bi, ri, 0)),
            ),
            compiler_params=cparams,
        )(xr)
        return rows.reshape(b, r * 128)[:, :s].reshape(b, h, w)

    if reduction not in ("mean", "sum"):
        raise ValueError(f"unknown reduction: {reduction}")

    psums = pl.pallas_call(
        _make_psum_kernel(s, tr),
        out_shape=jax.ShapeDtypeStruct((b, n_tiles, 8, 128), jnp.float32),
        grid_spec=pltpu.PrefetchScalarGridSpec(
            num_scalar_prefetch=0,
            grid=grid,
            in_specs=[in_spec],
            out_specs=pl.BlockSpec((None, None, 8, 128),
                                   lambda bi, ri: (bi, ri, 0, 0)),
        ),
        compiler_params=cparams,
    )(xr)

    total = jnp.sum(psums)                       # tiny wrapper-side reduction
    if reduction == "mean":
        return (total / (b * s)).astype(x.dtype)
    return total.astype(x.dtype)


def _reference(x, reduction="mean"):
    p = jax.nn.softmax(x, axis=1)
    logp = jax.nn.log_softmax(x, axis=1)
    ent = -jnp.sum(p * logp, axis=1)
    if reduction == "mean":
        return ent.mean()
    elif reduction == "sum":
        return ent.sum()
    return ent


if __name__ == "__main__":
    key = jax.random.PRNGKey(0)
    x = jax.random.normal(key, (2, 4, 16, 16), dtype=jnp.float32)

    out_mean = jax.block_until_ready(entropy_loss(x, reduction="mean"))
    out_sum = jax.block_until_ready(entropy_loss(x, reduction="sum"))
    out_none = jax.block_until_ready(entropy_loss(x, reduction="none"))

    ref_mean = _reference(x, "mean")
    ref_sum = _reference(x, "sum")
    ref_none = _reference(x, "none")

    assert out_none.shape == (2, 16, 16)
    # Tolerances account for the in-kernel EUP approx-reciprocal.
    assert jnp.allclose(out_mean, ref_mean, rtol=5e-3, atol=5e-3)
    assert jnp.allclose(out_sum, ref_sum, rtol=5e-3, atol=5e-3)
    assert jnp.allclose(out_none, ref_none, rtol=5e-3, atol=5e-3)

    # Ragged spatial size (exercises padding + in-kernel masking).
    x2 = jax.random.normal(jax.random.PRNGKey(0), (1, 3, 5, 7), dtype=jnp.float32)
    out2_mean = jax.block_until_ready(entropy_loss(x2, reduction="mean"))
    out2_none = jax.block_until_ready(entropy_loss(x2, reduction="none"))
    assert out2_none.shape == (1, 5, 7)
    assert jnp.allclose(out2_mean, _reference(x2, "mean"), rtol=5e-3, atol=5e-3)
    assert jnp.allclose(out2_none, _reference(x2, "none"), rtol=5e-3, atol=5e-3)

    print("KERNEL_OK")
</pallas_src>

<mosaic_0001>
module attributes {stable_mosaic.version = 11 : i64} {
  func.func @kernel(%arg0: i32, %arg1: i32, %arg2: memref<1x4x8x128xf32, #tpu.memory_space<vmem>>, %arg3: memref<1x1x8x128xf32, #tpu.memory_space<vmem>>) attributes {dimension_semantics = [#tpu.dimension_semantics<parallel>, #tpu.dimension_semantics<parallel>], iteration_bounds = array<i64: 2, 1>, scalar_prefetch = 0 : i64, scratch_operands = 0 : i64, tpu.core_type = #tpu.core_type<tc>, window_params = [{transform_indices = @transform_0, window_bounds = array<i64: 1, 4, 8, 128>}, {transform_indices = @transform_1, window_bounds = array<i64: 1, 1, 8, 128>}]} {
    %c0 = arith.constant 0 : index
    %c0_0 = arith.constant 0 : index
    %c0_1 = arith.constant 0 : index
    %c0_2 = arith.constant 0 : index
    %0 = vector.load %arg2[%c0, %c0_0, %c0_1, %c0_2] : memref<1x4x8x128xf32, #tpu.memory_space<vmem>>, vector<1x4x8x128xf32>
    %1 = vector.shape_cast %0 : vector<1x4x8x128xf32> to vector<4x8x128xf32>
    %cst = arith.constant dense<0xFF800000> : vector<8x128xf32>
    %2 = vector.multi_reduction <maximumf>, %1, %cst [0] : vector<4x8x128xf32> to vector<8x128xf32>
    %3 = vector.shape_cast %2 : vector<8x128xf32> to vector<1x8x128xf32>
    %4 = vector.broadcast %3 : vector<1x8x128xf32> to vector<4x8x128xf32>
    %5 = arith.subf %1, %4 : vector<4x8x128xf32>
    %6 = math.exp %5 : vector<4x8x128xf32>
    %cst_3 = arith.constant dense<0.000000e+00> : vector<8x128xf32>
    %7 = vector.multi_reduction <add>, %6, %cst_3 [0] : vector<4x8x128xf32> to vector<8x128xf32>
    %8 = arith.mulf %6, %5 : vector<4x8x128xf32>
    %cst_4 = arith.constant dense<0.000000e+00> : vector<8x128xf32>
    %9 = vector.multi_reduction <add>, %8, %cst_4 [0] : vector<4x8x128xf32> to vector<8x128xf32>
    %10 = math.log %7 : vector<8x128xf32>
    %11 = tpu.reciprocal %7 {approx = true} : vector<8x128xf32> -> vector<8x128xf32>
    %12 = arith.mulf %9, %11 : vector<8x128xf32>
    %13 = arith.subf %10, %12 : vector<8x128xf32>
    %14 = tpu.iota {dimensions = array<i32: 0>} : vector<8x128xi32>
    %15 = tpu.iota {dimensions = array<i32: 1>} : vector<8x128xi32>
    %c8_i32 = arith.constant 8 : i32
    %16 = arith.muli %arg1, %c8_i32 : i32
    %17 = vector.broadcast %16 : i32 to vector<8x128xi32>
    %18 = arith.addi %17, %14 : vector<8x128xi32>
    %c128_i32 = arith.constant 128 : i32
    %19 = vector.broadcast %c128_i32 : i32 to vector<8x128xi32>
    %20 = arith.muli %18, %19 : vector<8x128xi32>
    %21 = arith.addi %20, %15 : vector<8x128xi32>
    %c256_i32 = arith.constant 256 : i32
    %22 = vector.broadcast %c256_i32 : i32 to vector<8x128xi32>
    %23 = arith.cmpi slt, %21, %22 : vector<8x128xi32>
    %cst_5 = arith.constant 0.000000e+00 : f32
    %24 = vector.broadcast %cst_5 : f32 to vector<8x128xf32>
    %25 = arith.select %23, %13, %24 : vector<8x128xi1>, vector<8x128xf32>
    %26 = vector.shape_cast %25 : vector<8x128xf32> to vector<1x8x128xf32>
    %cst_6 = arith.constant dense<0.000000e+00> : vector<8x128xf32>
    %27 = vector.multi_reduction <add>, %26, %cst_6 [0] : vector<1x8x128xf32> to vector<8x128xf32>
    %c0_7 = arith.constant 0 : index
    %c0_8 = arith.constant 0 : index
    %c0_9 = arith.constant 0 : index
    %c0_10 = arith.constant 0 : index
    %28 = vector.load %arg3[%c0_7, %c0_8, %c0_9, %c0_10] : memref<1x1x8x128xf32, #tpu.memory_space<vmem>>, vector<1x1x8x128xf32>
    %29 = vector.shape_cast %28 : vector<1x1x8x128xf32> to vector<8x128xf32>
    %30 = vector.shape_cast %27 : vector<8x128xf32> to vector<1x1x8x128xf32>
    tpu.vector_store %arg3[%c0_7, %c0_8, %c0_9, %c0_10], %30 {strides = array<i32>} : memref<1x1x8x128xf32, #tpu.memory_space<vmem>>, vector<1x1x8x128xf32>,
    return
  }
  func.func @transform_0(%arg0: i32, %arg1: i32) -> (i32, i32, i32, i32) {
    %c0_i32 = arith.constant 0 : i32
    %c0_i32_0 = arith.constant 0 : i32
    %c0_i32_1 = arith.constant 0 : i32
    return %arg0, %c0_i32, %arg1, %c0_i32_0 : i32, i32, i32, i32
  }
  func.func @transform_1(%arg0: i32, %arg1: i32) -> (i32, i32, i32, i32) {
    %c0_i32 = arith.constant 0 : i32
    %c0_i32_0 = arith.constant 0 : i32
    %c0_i32_1 = arith.constant 0 : i32
    return %arg0, %arg1, %c0_i32, %c0_i32_0 : i32, i32, i32, i32
  }
}

</mosaic_0001>

<llo_original>
// kernel: entropy_loss.1
$region0: #{entropy_loss.1}
  #allocation0 [shape = 'u32[]', space=smem, size = 0x4, offset = 0x4, fixed_abs, tag = 'smem constant byte address 0x4 - core index']
  #allocation1 [shape = 'u32[72,128]{1,0:T(1,128)}', space=vmem, size = 0x9000, scoped, tag = 'internal scratch']
  %s0 = inlined_call_operand.vmem [shape: f32[2,4,8,128], index: 0, kind: input, shape index: {}]
  %s1 = inlined_call_operand.vmem [shape: f32[2,1,8,128], index: 1, kind: output, shape index: {}]
  %s2 = sld [smem:[#allocation0]]
  $region37: #{entropy_loss.1} parent=0
    _
  %s4 = ssub.s32 1, %s2
  %s5 = scalar_select 0, %s4, %s2
  loop: start=0, step=1, limit=4
  $region2: #{entropy_loss.1} parent=0 // loop_pre_header
    _
  $region3: #{entropy_loss.1} parent=0 // loop_header
    %s7 = sphi 0, %s11
    %p8 = scmp.ge.s32.totalorder %s7, 4
    %s14 = sphi 0, %s26
    %s15 = sphi 0, %s22
    %s16 = sphi 0, %s14
    %s17 = sphi 0, %s15
    %s18 = sphi 0, %s16
    %s19 = sphi 0, %s17
    %s31 = sphi 0, %s33
    %s34 = sphi 0, %s31
    %s35 = sphi 0, %s34
    %s51 = sphi 0, %s35
    %s59 = sphi 0, %s61
    %s62 = sphi 0, %s59
    %s63 = sphi 0, %s62
    %s79 = sphi 0, %s63
  $region4: #{entropy_loss.1} parent=0 // loop_header_branch
    %10 = sbr.rel (%p8) target = $region8
  $region5: #{entropy_loss.1} parent=0 // loop_body
    %s12 = ssub.s32 %s7, 1
    %s13 = ssub.s32 %s7, 2
    %s20 = sadd.s32 1, %s15
    %p21 = scmp.ge.s32.totalorder %s20, 1
    %s22 = scalar_select %p21, 0, %s20
    %s23 = sadd.s32 1, %s14
    %s24 = scalar_select %p21, %s23, %s14
    %p25 = scmp.ge.s32.totalorder %s24, 2
    %s26 = scalar_select %p25, 0, %s24
    %s27 = ssub.s32 %s14, %s26
    %s28 = ssub.s32 %s15, %s22
    %s29 = sor.u32 %s27, %s28
    %p30 = scmp.eq.s32.totalorder %s29, 0
    %s32 = sadd.s32 %s31, 1
    %s33 = scalar_select %p30, %s31, %s32
    %p36 = pneg %p30
    %p37 = scmp.eq.s32.totalorder %s7, 1
    %p38 = por %p36, %p37
    %p39 = scmp.ne.s32.totalorder %s31, %s34
    %p40 = scmp.eq.s32.totalorder %s7, 0
    %p41 = por %p39, %p40
    %p42 = scmp.ne.s32.totalorder %s31, %s34
    %p43 = scmp.eq.s32.totalorder %s12, 1
    %p44 = por %p42, %p43
    %p45 = scmp.ne.s32.totalorder %s34, %s35
    %p46 = scmp.eq.s32.totalorder %s12, 0
    %p47 = por %p45, %p46
    %p48 = scmp.ne.s32.totalorder %s34, %s35
    %p49 = scmp.eq.s32.totalorder %s13, 1
    %p50 = por %p48, %p49
    %p52 = scmp.ne.s32.totalorder %s35, %s51
    %p53 = scmp.eq.s32.totalorder %s13, 0
    %p54 = por %p52, %p53
    %s55 = ssub.s32 %s14, %s26
    %s56 = ssub.s32 %s15, %s22
    %s57 = sor.u32 %s55, %s56
    %p58 = scmp.eq.s32.totalorder %s57, 0
    %s60 = sadd.s32 %s59, 1
    %s61 = scalar_select %p58, %s59, %s60
    %p64 = pneg %p58
    %p65 = scmp.eq.s32.totalorder %s7, 1
    %p66 = por %p64, %p65
    %p67 = scmp.ne.s32.totalorder %s59, %s62
    %p68 = scmp.eq.s32.totalorder %s7, 0
    %p69 = por %p67, %p68
    %p70 = scmp.ne.s32.totalorder %s59, %s62
    %p71 = scmp.eq.s32.totalorder %s12, 1
    %p72 = por %p70, %p71
    %p73 = scmp.ne.s32.totalorder %s62, %s63
    %p74 = scmp.eq.s32.totalorder %s12, 0
    %p75 = por %p73, %p74
    %p76 = scmp.ne.s32.totalorder %s62, %s63
    %p77 = scmp.eq.s32.totalorder %s13, 1
    %p78 = por %p76, %p77
    %p80 = scmp.ne.s32.totalorder %s63, %s79
    %p81 = scmp.eq.s32.totalorder %s13, 0
    %p82 = por %p80, %p81
    %p83 = scmp.le.s32.totalorder 1, %s7
    %p84 = scmp.lt.s32.totalorder %s7, 3
    %p85 = pnand %p83, %p84
    %p86 = pneg %p85
    // Predicated region
    $region9: #{entropy_loss.1} parent=5 // pred_check
      _
    $region10: #{entropy_loss.1} parent=5 // pred_check_branch
      %88 = sbr.rel (%p85) target = $region12
    $region11: #{entropy_loss.1} parent=5 // pred_region
      %s89 = ssub.s32 %s7, 1
    $region12: #{entropy_loss.1} parent=5 // pred_fallthru
      _
    %p90 = scmp.lt.s32.totalorder %s7, 2
    // Predicated region
    $region13: #{entropy_loss.1} parent=5 // pred_check
      %p91 = pneg %p90
    $region14: #{entropy_loss.1} parent=5 // pred_check_branch
      %93 = sbr.rel (%p91) target = $region16
    $region15: #{entropy_loss.1} parent=5 // pred_region
      // Predicated region
      $region17: #{entropy_loss.1} parent=15 // pred_check
        %p94 = pneg %p41
      $region18: #{entropy_loss.1} parent=15 // pred_check_branch
        %96 = sbr.rel (%p94) target = $region20
      $region19: #{entropy_loss.1} parent=15 // pred_region
        %p97 = scmp.lt.s32.totalorder %s14, 1
        %s98 = scalar_select %p97, %s14, 1
        %p99 = scmp.lt.s32.totalorder %s15, 0
        %s100 = scalar_select %p99, %s15, 0
        %s101 = smul.addr %s98, 4
        %s102 = sadd.s32 %s100, %s101
        %s103 = smul.addr %s102, 8
        %s104 = scalar_lea.vmem %s0, %s103
      $region20: #{entropy_loss.1} parent=15 // pred_fallthru
        _
    $region16: #{entropy_loss.1} parent=5 // pred_fallthru
      _
    %p105 = scmp.le.s32.totalorder 1, %s7
    %p106 = scmp.lt.s32.totalorder %s7, 3
    %p107 = pnand %p105, %p106
    %p108 = pneg %p107
    // Predicated region
    $region21: #{entropy_loss.1} parent=5 // pred_check
      _
    $region22: #{entropy_loss.1} parent=5 // pred_check_branch
      %110 = sbr.rel (%p107) target = $region24
    $region23: #{entropy_loss.1} parent=5 // pred_region
      %s111 = ssub.s32 %s7, 1
      %p112 = scmp.lt.s32.totalorder %s16, 1
      %s113 = scalar_select %p112, %s16, 1
      %p114 = scmp.lt.s32.totalorder %s17, 0
      %s115 = scalar_select %p114, %s17, 0
      %s116 = smul.addr %s113, 4
      %s117 = sadd.s32 %s115, %s116
      %s118 = smul.addr %s117, 8
      %s119 = scalar_lea.vmem %s0, %s118
      %p120 = pneg %p47
      %p121 = pneg %p44
      %p122 = pneg %p75
      %p123 = pneg %p72
      %p124 = scmp.lt.s32.totalorder %s16, 1
      %s125 = scalar_select %p124, %s16, 1
      %p126 = scmp.lt.s32.totalorder %s17, 0
      %s127 = scalar_select %p126, %s17, 0
      %s128 = sadd.s32 %s127, %s125
      %s129 = smul.addr %s128, 8
      %s130 = scalar_lea.vmem %s1, %s129
      %p131 = scmp.lt.s32.totalorder %s16, 1
      %s132 = scalar_select %p131, %s16, 1
      %p133 = scmp.lt.s32.totalorder %s17, 0
      %s134 = scalar_select %p133, %s17, 0
      %s135 = smul.addr %s132, 4
      %s136 = sadd.s32 %s134, %s135
      %s137 = smul.addr %s136, 8
      %s138 = scalar_lea.vmem %s0, %s137
      %p139 = scmp.lt.s32.totalorder %s16, 1
      %s140 = scalar_select %p139, %s16, 1
      %p141 = scmp.lt.s32.totalorder %s17, 0
      %s142 = scalar_select %p141, %s17, 0
      %s143 = sadd.s32 %s142, %s140
      %s144 = smul.addr %s143, 8
      %s145 = scalar_lea.vmem %s1, %s144
      %v146 = vld [vmem:[%s138] sm:$0xff]
      %v147 = vld [vmem:[%s138 + $0x8] sm:$0xff]
      %v148 = vld [vmem:[%s138 + $0x10] sm:$0xff]
      %v149 = vld [vmem:[%s138 + $0x18] sm:$0xff]
      %v150 = vmax.f32 %v146, %v147
      %v151 = vmax.f32 %v148, %v149
      %v152 = vmax.f32 %v150, %v151
      %v153 = vsub.f32 %v146, %v152
      %v154 = vsub.f32 %v147, %v152
      %v155 = vsub.f32 %v148, %v152
      %v156 = vsub.f32 %v149, %v152
      %v157 = vmul.f32 %v153, 1.442695
      %v158 = vpow.pop %v157
      %v159 = vmul.f32 %v154, 1.442695
      %v160 = vpow.pop %v159
      %v161 = vmul.f32 %v155, 1.442695
      %v162 = vpow.pop %v161
      %v163 = vmul.f32 %v156, 1.442695
      %v164 = vpow.pop %v163
      %v165 = vadd.f32 %v158, %v160
      %v166 = vadd.f32 %v165, %v162
      %v167 = vadd.f32 %v166, %v164
      %v168 = vmul.f32 %v158, %v153
      %v169 = vmul.f32 %v160, %v154
      %v170 = vmul.f32 %v162, %v155
      %v171 = vmul.f32 %v164, %v156
      %v172 = vadd.f32 %v168, %v169
      %v173 = vadd.f32 %v172, %v170
      %v174 = vadd.f32 %v173, %v171
      %v175 = vlog2.pop %v167
      %v176 = vmul.f32 %v175, 0.6931472
      %v177 = vrcp.pop %v167
      %v178 = vmul.f32 %v174, %v177
      %v179 = vsub.f32 %v176, %v178
      %v180 = vlaneseq
      %v181 = vshrl.u32 %v180, 7
      %v182 = vlaneseq
      %v183 = vand.u32 %v182, 127
      %s184 = smul.u32 %s17, 8
      %v185 = vstv %s184
      %v186 = vadd.s32 %v185, %v181
      %v187 = vmul.u32 %v186, 128
      %v188 = vadd.s32 %v187, %v183
      %vm189 = vcmp.lt.s32.totalorder %v188, 256
      %v190 = vsel %vm189, %v179, 0.0
      %v191 = vadd.f32 %v190, 0.0
      %192 = vst [vmem:[%s145] sm:$0xff] %v191
      %p193 = scmp.lt.s32.totalorder %s16, 1
      %s194 = scalar_select %p193, %s16, 1
      %p195 = scmp.lt.s32.totalorder %s17, 0
      %s196 = scalar_select %p195, %s17, 0
      %s197 = sadd.s32 %s196, %s194
      %s198 = smul.addr %s197, 8
      %s199 = scalar_lea.vmem %s1, %s198
      // Predicated region
      $region25: #{entropy_loss.1} parent=23 // pred_check
        %p200 = pneg %p72
      $region26: #{entropy_loss.1} parent=23 // pred_check_branch
        %202 = sbr.rel (%p200) target = $region28
      $region27: #{entropy_loss.1} parent=23 // pred_region
        _
      $region28: #{entropy_loss.1} parent=23 // pred_fallthru
        _
    $region24: #{entropy_loss.1} parent=5 // pred_fallthru
      _
    %p203 = scmp.le.s32.totalorder 2, %s7
    // Predicated region
    $region29: #{entropy_loss.1} parent=5 // pred_check
      %p204 = pneg %p203
    $region30: #{entropy_loss.1} parent=5 // pred_check_branch
      %206 = sbr.rel (%p204) target = $region32
    $region31: #{entropy_loss.1} parent=5 // pred_region
      %s207 = ssub.s32 %s7, 2
      // Predicated region
      $region33: #{entropy_loss.1} parent=31 // pred_check
        %p208 = pneg %p78
      $region34: #{entropy_loss.1} parent=31 // pred_check_branch
        %210 = sbr.rel (%p208) target = $region36
      $region35: #{entropy_loss.1} parent=31 // pred_region
        %p211 = scmp.lt.s32.totalorder %s18, 1
        %s212 = scalar_select %p211, %s18, 1
        %p213 = scmp.lt.s32.totalorder %s19, 0
        %s214 = scalar_select %p213, %s19, 0
        %s215 = sadd.s32 %s214, %s212
        %s216 = smul.addr %s215, 8
        %s217 = scalar_lea.vmem %s1, %s216
      $region36: #{entropy_loss.1} parent=31 // pred_fallthru
        _
    $region32: #{entropy_loss.1} parent=5 // pred_fallthru
      _
  $region6: #{entropy_loss.1} parent=0 // loop_footer
    %s11 = sadd.s32 1, %s7
  $region7: #{entropy_loss.1} parent=0 // loop_footer_branch
    %6 = sbr.rel target = $region3
  $region8: #{entropy_loss.1} parent=0 // loop_exit
    _

</llo_original>
